<compile_context>
chip_gen: v5e
topology: v5e:2x2
jax: 0.10.0
libtpu: 0.0.40
codegen_flags: <defaults>
</compile_context>

<pallas_src>
import functools
import math

import jax
import jax.numpy as jnp
from jax.experimental import pallas as pl
from jax.experimental.pallas import tpu as pltpu


# --------------------------- helpers ------------------------------------------

def _round_up(x, m):
    return ((x + m - 1) // m) * m


def _largest_divisor_tile(dim, candidates):
    """Largest candidate <= dim that evenly divides dim (dim is pre-padded)."""
    for c in candidates:
        if c <= dim and dim % c == 0:
            return c
    return dim


def _vmem_limit_bytes(default=64 << 20):
    """Generation-aware scoped-VMEM limit; safe fallback if query unavailable."""
    try:
        info = pltpu.get_tpu_info()
        cap = getattr(info, "vmem_capacity_bytes", None)
        if not cap:
            return default
        if cap >= (128 << 20):          # v5e / v6e: 128 MiB physical
            return 96 << 20
        # v7x: 64 MiB per TensorCore -- leave compiler headroom
        return min(cap - (8 << 20), 56 << 20)
    except Exception:
        return default


# --------------------------- Pallas kernels ------------------------------------

def _transform_kernel(x_ref, w_ref, b_ref, g_ref, beta_ref, o_ref, *, eps):
    # x: (tm, H) f32, w: (H, H) bf16, b/g/beta: (1, H) f32, o: (tm, H) bf16
    x = x_ref[...].astype(jnp.bfloat16)
    y = jnp.dot(x, w_ref[...], preferred_element_type=jnp.float32)
    y = y + b_ref[...]
    # exact erf-based GELU (matches the PyTorch `gelu`), computed in f32
    y = y * 0.5 * (1.0 + jax.lax.erf(y * (1.0 / math.sqrt(2.0))))
    # LayerNorm over the hidden (lane) axis, biased variance like torch
    mean = jnp.mean(y, axis=-1, keepdims=True)
    var = jnp.mean(jnp.square(y - mean), axis=-1, keepdims=True)
    o_ref[...] = ((y - mean) * jax.lax.rsqrt(var + eps) * g_ref[...]
                  + beta_ref[...]).astype(o_ref.dtype)


def _decoder_kernel(y_ref, w_ref, bias_ref, o_ref):
    # y: (tm, H) bf16, w: (H, tn) bf16, bias: (1, tn) f32, o: (tm, tn) f32
    o_ref[...] = (jnp.dot(y_ref[...], w_ref[...],
                          preferred_element_type=jnp.float32)
                  + bias_ref[...]).astype(o_ref.dtype)


# --------------------------- kernel wrappers ------------------------------------

def mlm_transform(x2, w_bf16, b, gamma, beta, *, eps):
    """Fused dense + GELU + LayerNorm on a flattened, row-padded [M, H] slab."""
    M, H = x2.shape
    assert M % 128 == 0, "rows must be pre-padded to a multiple of 128"
    tm = _largest_divisor_tile(M, (2048, 1024, 512, 256, 128))
    grid = (M // tm,)
    cost = pl.CostEstimate(
        flops=2 * M * H * H + 10 * M * H,
        transcendentals=M * H,
        bytes_accessed=4 * M * H + 2 * M * H + 2 * H * H + 3 * 4 * H,
    )
    return pl.pallas_call(
        functools.partial(_transform_kernel, eps=eps),
        out_shape=jax.ShapeDtypeStruct((M, H), jnp.bfloat16),
        grid=grid,
        in_specs=[
            pl.BlockSpec((tm, H), lambda i: (i, 0)),
            pl.BlockSpec((H, H), lambda i: (0, 0)),   # weight resident across M
            pl.BlockSpec((1, H), lambda i: (0, 0)),
            pl.BlockSpec((1, H), lambda i: (0, 0)),
            pl.BlockSpec((1, H), lambda i: (0, 0)),
        ],
        out_specs=pl.BlockSpec((tm, H), lambda i: (i, 0)),
        compiler_params=pltpu.CompilerParams(
            dimension_semantics=("parallel",),
            vmem_limit_bytes=_vmem_limit_bytes(),
        ),
        cost_estimate=cost,
    )(x2, w_bf16, b, gamma, beta)


def mlm_decoder(y2, w_bf16, bias):
    """Tiled matmul [M, H] x [H, Vp] + bias -> [M, Vp] logits (single-shot K)."""
    M, H = y2.shape
    Vp = w_bf16.shape[1]
    assert M % 128 == 0 and Vp % 256 == 0
    tm = _largest_divisor_tile(M, (512, 384, 256, 128))
    tn = _largest_divisor_tile(Vp, (1024, 512, 256))
    grid = (M // tm, Vp // tn)
    cost = pl.CostEstimate(
        flops=2 * M * H * Vp,
        transcendentals=0,
        # weight is re-streamed once per row tile
        bytes_accessed=2 * M * H + (M // tm) * 2 * H * Vp + 4 * Vp + 4 * M * Vp,
    )
    return pl.pallas_call(
        _decoder_kernel,
        out_shape=jax.ShapeDtypeStruct((M, Vp), jnp.float32),
        grid=grid,
        in_specs=[
            pl.BlockSpec((tm, H), lambda i, j: (i, 0)),   # bf16 activations
            pl.BlockSpec((H, tn), lambda i, j: (0, j)),   # bf16 weight stream
            pl.BlockSpec((1, tn), lambda i, j: (0, j)),   # f32 bias
        ],
        out_specs=pl.BlockSpec((tm, tn), lambda i, j: (i, j)),
        compiler_params=pltpu.CompilerParams(
            dimension_semantics=("parallel", "parallel"),
            vmem_limit_bytes=_vmem_limit_bytes(),
        ),
        cost_estimate=cost,
    )(y2, w_bf16, bias)


# --------------------------- model (JAX glue) -----------------------------------

def bert_only_mlm_head_forward(params, sequence_output, *, layer_norm_eps):
    """BertOnlyMLMHead.forward: sequence_output [B, S, H] -> logits [B, S, V]."""
    B, S, H = sequence_output.shape
    V = params["decoder_w"].shape[1]
    M0 = B * S
    x2 = sequence_output.reshape(M0, H)

    # Pad rows to a 128 multiple so both kernels always get 128-aligned tiles.
    M = _round_up(M0, 128)
    if M != M0:
        x2 = jnp.pad(x2, ((0, M - M0), (0, 0)))

    # Pad vocab to a 256 multiple (e.g. 30522 -> 30720) so the vocab tile is a
    # lane-friendly divisor and never falls back to the full (huge) dimension.
    Vp = _round_up(V, 256)
    w2 = params["decoder_w"]
    dec_bias = params["decoder_bias"]
    if Vp != V:
        w2 = jnp.pad(w2, ((0, 0), (0, Vp - V)))
        dec_bias = jnp.pad(dec_bias, ((0, 0), (0, Vp - V)))

    h = mlm_transform(
        x2,
        params["transform_w"],           # bf16 (H, H)
        params["transform_b"],           # f32  (1, H)
        params["ln_gamma"],              # f32  (1, H)
        params["ln_beta"],               # f32  (1, H)
        eps=layer_norm_eps,
    )                                    # bf16 (M, H)
    logits = mlm_decoder(h, w2, dec_bias)   # f32 (M, Vp)
    return logits[:M0, :V].reshape(B, S, V)


# --------------------------- reference (pure JAX, f32) ---------------------------

def reference_forward(fp32_params, sequence_output, *, layer_norm_eps):
    w1, b1, g, beta, w2, bias = fp32_params
    h = sequence_output @ w1 + b1
    h = h * 0.5 * (1.0 + jax.lax.erf(h / math.sqrt(2.0)))
    mean = jnp.mean(h, axis=-1, keepdims=True)
    var = jnp.mean(jnp.square(h - mean), axis=-1, keepdims=True)
    h = (h - mean) / jnp.sqrt(var + layer_norm_eps) * g + beta
    return h @ w2 + bias


# --------------------------- main -------------------------------------------------

if __name__ == "__main__":
    cfg = dict(
        hidden_size=128,
        vocab_size=512,
        layer_norm_eps=1e-12,
        hidden_act="gelu",
    )
    B, S = 2, 8
    H, V = cfg["hidden_size"], cfg["vocab_size"]

    root = jax.random.PRNGKey(0)
    kx, kw1, kb1, kg, kbe, kw2, kbv = jax.random.split(root, 7)

    sequence_output = jax.random.normal(kx, (B, S, H), jnp.float32)

    w1 = 0.02 * jax.random.normal(kw1, (H, H), jnp.float32)
    b1 = 0.02 * jax.random.normal(kb1, (1, H), jnp.float32)
    gamma = 1.0 + 0.01 * jax.random.normal(kg, (1, H), jnp.float32)
    beta = 0.01 * jax.random.normal(kbe, (1, H), jnp.float32)
    w2 = 0.02 * jax.random.normal(kw2, (H, V), jnp.float32)
    dec_bias = 0.02 * jax.random.normal(kbv, (1, V), jnp.float32)

    params = {
        "transform_w": w1.astype(jnp.bfloat16),
        "transform_b": b1,
        "ln_gamma": gamma,
        "ln_beta": beta,
        "decoder_w": w2.astype(jnp.bfloat16),
        "decoder_bias": dec_bias,
    }

    logits = bert_only_mlm_head_forward(
        params, sequence_output, layer_norm_eps=cfg["layer_norm_eps"])
    logits = jax.block_until_ready(logits)

    assert logits.shape == (B, S, V)
    assert bool(jnp.all(jnp.isfinite(logits)))

    ref = reference_forward((w1, b1, gamma, beta, w2, dec_bias),
                            sequence_output,
                            layer_norm_eps=cfg["layer_norm_eps"])
    max_err = float(jnp.max(jnp.abs(logits - ref)))
    # bf16 matmul inputs + bf16 intermediate h, f32 accumulate: bounded error
    assert max_err < 5e-2, f"max abs error too large: {max_err}"

    print("KERNEL_OK")
</pallas_src>

<mosaic_0001>
module attributes {stable_mosaic.version = 11 : i64} {
  func.func @_transform_kernel(%arg0: i32, %arg1: memref<128x128xf32, #tpu.memory_space<vmem>>, %arg2: memref<128x128xbf16, #tpu.memory_space<vmem>>, %arg3: memref<1x128xf32, #tpu.memory_space<vmem>>, %arg4: memref<1x128xf32, #tpu.memory_space<vmem>>, %arg5: memref<1x128xf32, #tpu.memory_space<vmem>>, %arg6: memref<128x128xbf16, #tpu.memory_space<vmem>>) attributes {dimension_semantics = [#tpu.dimension_semantics<parallel>], iteration_bounds = array<i64: 1>, scalar_prefetch = 0 : i64, scratch_operands = 0 : i64, tpu.core_type = #tpu.core_type<tc>, window_params = [{transform_indices = @transform_0, window_bounds = array<i64: 128, 128>}, {pipeline_mode = #tpu.pipeline_mode<synchronous>, transform_indices = @transform_1, window_bounds = array<i64: 128, 128>}, {pipeline_mode = #tpu.pipeline_mode<synchronous>, transform_indices = @transform_2, window_bounds = array<i64: 1, 128>}, {pipeline_mode = #tpu.pipeline_mode<synchronous>, transform_indices = @transform_3, window_bounds = array<i64: 1, 128>}, {pipeline_mode = #tpu.pipeline_mode<synchronous>, transform_indices = @transform_4, window_bounds = array<i64: 1, 128>}, {transform_indices = @transform_5, window_bounds = array<i64: 128, 128>}]} {
    %c0 = arith.constant 0 : index
    %c0_0 = arith.constant 0 : index
    %0 = vector.load %arg1[%c0, %c0_0] : memref<128x128xf32, #tpu.memory_space<vmem>>, vector<128x128xf32>
    %1 = arith.truncf %0 : vector<128x128xf32> to vector<128x128xbf16>
    %c0_1 = arith.constant 0 : index
    %c0_2 = arith.constant 0 : index
    %2 = vector.load %arg2[%c0_1, %c0_2] : memref<128x128xbf16, #tpu.memory_space<vmem>>, vector<128x128xbf16>
    %cst = arith.constant dense<0.000000e+00> : vector<128x128xf32>
    %3 = tpu.matmul %1, %2, %cst {dimension_numbers = #tpu.dot_dimension_numbers<[1], [0], [0], [1], [0, 0, 1, 1], [], []>} : vector<128x128xbf16>, vector<128x128xbf16>, vector<128x128xf32> -> vector<128x128xf32>
    %c0_3 = arith.constant 0 : index
    %c0_4 = arith.constant 0 : index
    %4 = vector.load %arg3[%c0_3, %c0_4] : memref<1x128xf32, #tpu.memory_space<vmem>>, vector<1x128xf32>
    %5 = vector.broadcast %4 : vector<1x128xf32> to vector<128x128xf32>
    %6 = arith.addf %3, %5 : vector<128x128xf32>
    %cst_5 = arith.constant 5.000000e-01 : f32
    %7 = vector.broadcast %cst_5 : f32 to vector<128x128xf32>
    %8 = arith.mulf %6, %7 : vector<128x128xf32>
    %cst_6 = arith.constant 0.707106769 : f32
    %9 = vector.broadcast %cst_6 : f32 to vector<128x128xf32>
    %10 = arith.mulf %6, %9 : vector<128x128xf32>
    %11 = math.erf %10 : vector<128x128xf32>
    %cst_7 = arith.constant 1.000000e+00 : f32
    %12 = vector.broadcast %cst_7 : f32 to vector<128x128xf32>
    %13 = arith.addf %12, %11 : vector<128x128xf32>
    %14 = arith.mulf %8, %13 : vector<128x128xf32>
    %cst_8 = arith.constant dense<0.000000e+00> : vector<128xf32>
    %15 = vector.multi_reduction <add>, %14, %cst_8 [1] : vector<128x128xf32> to vector<128xf32>
    %16 = vector.shape_cast %15 : vector<128xf32> to vector<128x1xf32>
    %cst_9 = arith.constant 1.280000e+02 : f32
    %17 = vector.broadcast %cst_9 : f32 to vector<128x1xf32>
    %18 = arith.divf %16, %17 : vector<128x1xf32>
    %19 = vector.broadcast %18 : vector<128x1xf32> to vector<128x128xf32>
    %20 = arith.subf %14, %19 : vector<128x128xf32>
    %21 = arith.mulf %20, %20 : vector<128x128xf32>
    %cst_10 = arith.constant dense<0.000000e+00> : vector<128xf32>
    %22 = vector.multi_reduction <add>, %21, %cst_10 [1] : vector<128x128xf32> to vector<128xf32>
    %23 = vector.shape_cast %22 : vector<128xf32> to vector<128x1xf32>
    %cst_11 = arith.constant 1.280000e+02 : f32
    %24 = vector.broadcast %cst_11 : f32 to vector<128x1xf32>
    %25 = arith.divf %23, %24 : vector<128x1xf32>
    %26 = vector.broadcast %18 : vector<128x1xf32> to vector<128x128xf32>
    %27 = arith.subf %14, %26 : vector<128x128xf32>
    %cst_12 = arith.constant 9.99999996E-13 : f32
    %28 = vector.broadcast %cst_12 : f32 to vector<128x1xf32>
    %29 = arith.addf %25, %28 : vector<128x1xf32>
    %30 = math.rsqrt %29 : vector<128x1xf32>
    %31 = vector.broadcast %30 : vector<128x1xf32> to vector<128x128xf32>
    %32 = arith.mulf %27, %31 : vector<128x128xf32>
    %c0_13 = arith.constant 0 : index
    %c0_14 = arith.constant 0 : index
    %33 = vector.load %arg4[%c0_13, %c0_14] : memref<1x128xf32, #tpu.memory_space<vmem>>, vector<1x128xf32>
    %34 = vector.broadcast %33 : vector<1x128xf32> to vector<128x128xf32>
    %35 = arith.mulf %32, %34 : vector<128x128xf32>
    %c0_15 = arith.constant 0 : index
    %c0_16 = arith.constant 0 : index
    %36 = vector.load %arg5[%c0_15, %c0_16] : memref<1x128xf32, #tpu.memory_space<vmem>>, vector<1x128xf32>
    %37 = vector.broadcast %36 : vector<1x128xf32> to vector<128x128xf32>
    %38 = arith.addf %35, %37 : vector<128x128xf32>
    %39 = arith.truncf %38 : vector<128x128xf32> to vector<128x128xbf16>
    %c0_17 = arith.constant 0 : index
    %c0_18 = arith.constant 0 : index
    %40 = vector.load %arg6[%c0_17, %c0_18] : memref<128x128xbf16, #tpu.memory_space<vmem>>, vector<128x128xbf16>
    tpu.vector_store %arg6[%c0_17, %c0_18], %39 {strides = array<i32>} : memref<128x128xbf16, #tpu.memory_space<vmem>>, vector<128x128xbf16>,
    return
  }
  func.func @transform_0(%arg0: i32) -> (i32, i32) {
    %c0_i32 = arith.constant 0 : i32
    %c0_i32_0 = arith.constant 0 : i32
    return %arg0, %c0_i32 : i32, i32
  }
  func.func @transform_1(%arg0: i32) -> (i32, i32) {
    %c0_i32 = arith.constant 0 : i32
    %c0_i32_0 = arith.constant 0 : i32
    %c0_i32_1 = arith.constant 0 : i32
    return %c0_i32, %c0_i32_0 : i32, i32
  }
  func.func @transform_2(%arg0: i32) -> (i32, i32) {
    %c0_i32 = arith.constant 0 : i32
    %c0_i32_0 = arith.constant 0 : i32
    %c0_i32_1 = arith.constant 0 : i32
    return %c0_i32, %c0_i32_0 : i32, i32
  }
  func.func @transform_3(%arg0: i32) -> (i32, i32) {
    %c0_i32 = arith.constant 0 : i32
    %c0_i32_0 = arith.constant 0 : i32
    %c0_i32_1 = arith.constant 0 : i32
    return %c0_i32, %c0_i32_0 : i32, i32
  }
  func.func @transform_4(%arg0: i32) -> (i32, i32) {
    %c0_i32 = arith.constant 0 : i32
    %c0_i32_0 = arith.constant 0 : i32
    %c0_i32_1 = arith.constant 0 : i32
    return %c0_i32, %c0_i32_0 : i32, i32
  }
  func.func @transform_5(%arg0: i32) -> (i32, i32) {
    %c0_i32 = arith.constant 0 : i32
    %c0_i32_0 = arith.constant 0 : i32
    return %arg0, %c0_i32 : i32, i32
  }
}

</mosaic_0001>

<llo_original>
// kernel: tpu_custom_call.1
$region0: #{tpu_custom_call.1}
  #allocation0 [shape = 'u32[]', space=smem, size = 0x4, offset = 0x4, fixed_abs, tag = 'smem constant byte address 0x4 - core index']
  #allocation1 [shape = 'u32[72,128]{1,0:T(1,128)}', space=vmem, size = 0x9000, scoped, tag = 'internal scratch']
  %s0 = inlined_call_operand.hbm [shape: f32[128,128], index: 0, kind: input, shape index: {}]
  %s1 = inlined_call_operand.hbm [shape: bf16[128,128], index: 1, kind: input, shape index: {}]
  %s2 = inlined_call_operand.vmem [shape: f32[1,128], index: 2, kind: input, shape index: {}]
  %s3 = inlined_call_operand.vmem [shape: f32[1,128], index: 3, kind: input, shape index: {}]
  %s4 = inlined_call_operand.vmem [shape: f32[1,128], index: 4, kind: input, shape index: {}]
  %s5 = inlined_call_operand.hbm [shape: bf16[128,128], index: 5, kind: output, shape index: {}]
  %s6 = sld [smem:[#allocation0]]
  $region38: #{tpu_custom_call.1} parent=0
    _
  %s8 = ssub.s32 1, %s6
  %s9 = scalar_select 0, %s8, %s6
  $region1: #{tpu_custom_call.1} parent=0
    #allocation2 [shape = 'u8[65536]{0}', space=vmem, size = 0x10000, scoped, tag = 'input window, operand 0, single buffered']
    #allocation3 [shape = 's32[1]{0}', space=sflag, size = 0x4, scoped, tag = 'scoped memory for tpu_custom_call.1']
    #allocation4 [shape = 's32[1]{0}', space=sflag, size = 0x4, scoped, tag = 'scoped memory for tpu_custom_call.1']
    #allocation5 [shape = 'u8[32768]{0}', space=vmem, size = 0x8000, scoped, tag = 'input window, operand 1, single buffered']
    #allocation6 [shape = 's32[1]{0}', space=sflag, size = 0x4, scoped, tag = 'scoped memory for tpu_custom_call.1']
    #allocation7 [shape = 'u8[32768]{0}', space=vmem, size = 0x8000, scoped, tag = 'output window, operand 0, single buffered']
    %10 = vsyncpa [#allocation3], 0
    %11 = vsyncpa [#allocation6], 0
    %12 = vsyncpa [#allocation4], 0
    // Predicated region
    $region2: #{tpu_custom_call.1} parent=1 // pred_check
      _
    $region3: #{tpu_custom_call.1} parent=1 // pred_check_branch
      %14 = sbr.rel (0) target = $region5
    $region4: #{tpu_custom_call.1} parent=1 // pred_region
      %16 = vsyncadd [#allocation3], 0
      %s17 = sshll.u32 %s0, 4
      %s18 = int_to_ptr.hbm [resolvable:$true] %s17
      %s19 = sshll.u32 [#allocation2], 4
      %s20 = int_to_ptr.vmem [resolvable:$true] %s19
      %25 = dma.hbm_to_vmem [thread:$0]  %s18, 2048, %s20, [#allocation3], 128, 128, 8
    $region5: #{tpu_custom_call.1} parent=1 // pred_fallthru
      _
    // Predicated region
    $region6: #{tpu_custom_call.1} parent=1 // pred_check
      _
    $region7: #{tpu_custom_call.1} parent=1 // pred_check_branch
      %27 = sbr.rel (0) target = $region9
    $region8: #{tpu_custom_call.1} parent=1 // pred_region
      %29 = vsyncadd [#allocation6], 0
      %s30 = sshll.u32 %s1, 4
      %s31 = int_to_ptr.hbm [resolvable:$true] %s30
      %s32 = sshll.u32 [#allocation5], 4
      %s33 = int_to_ptr.vmem [resolvable:$true] %s32
      %38 = dma.hbm_to_vmem [thread:$0]  %s31, 1024, %s33, [#allocation6], 64, 64, 4
    $region9: #{tpu_custom_call.1} parent=1 // pred_fallthru
      _
    // Predicated region
    $region10: #{tpu_custom_call.1} parent=1 // pred_check
      _
    $region11: #{tpu_custom_call.1} parent=1 // pred_check_branch
      %40 = sbr.rel (0) target = $region13
    $region12: #{tpu_custom_call.1} parent=1 // pred_region
      _
    $region13: #{tpu_custom_call.1} parent=1 // pred_fallthru
      _
    // Predicated region
    $region14: #{tpu_custom_call.1} parent=1 // pred_check
      _
    $region15: #{tpu_custom_call.1} parent=1 // pred_check_branch
      %42 = sbr.rel (0) target = $region17
    $region16: #{tpu_custom_call.1} parent=1 // pred_region
      _
    $region17: #{tpu_custom_call.1} parent=1 // pred_fallthru
      _
    // Predicated region
    $region18: #{tpu_custom_call.1} parent=1 // pred_check
      _
    $region19: #{tpu_custom_call.1} parent=1 // pred_check_branch
      %44 = sbr.rel (0) target = $region21
    $region20: #{tpu_custom_call.1} parent=1 // pred_region
      _
    $region21: #{tpu_custom_call.1} parent=1 // pred_fallthru
      _
    // Predicated region
    $region22: #{tpu_custom_call.1} parent=1 // pred_check
      _
    $region23: #{tpu_custom_call.1} parent=1 // pred_check_branch
      %46 = sbr.rel (0) target = $region25
    $region24: #{tpu_custom_call.1} parent=1 // pred_region
      %48 = dma.done [#allocation3], 2048
    $region25: #{tpu_custom_call.1} parent=1 // pred_fallthru
      _
    // Predicated region
    $region26: #{tpu_custom_call.1} parent=1 // pred_check
      _
    $region27: #{tpu_custom_call.1} parent=1 // pred_check_branch
      %50 = sbr.rel (0) target = $region29
    $region28: #{tpu_custom_call.1} parent=1 // pred_region
      %52 = dma.done [#allocation6], 1024
    $region29: #{tpu_custom_call.1} parent=1 // pred_fallthru
      _
    %v53 = vld [vmem:[#allocation2] sm:$0xff]
    %v54 = vld [vmem:[#allocation2 + $0x8] sm:$0xff]
    %v55 = vld [vmem:[#allocation2 + $0x10] sm:$0xff]
    %v56 = vld [vmem:[#allocation2 + $0x18] sm:$0xff]
    %v57 = vld [vmem:[#allocation2 + $0x20] sm:$0xff]
    %v58 = vld [vmem:[#allocation2 + $0x28] sm:$0xff]
    %v59 = vld [vmem:[#allocation2 + $0x30] sm:$0xff]
    %v60 = vld [vmem:[#allocation2 + $0x38] sm:$0xff]
    %v61 = vld [vmem:[#allocation2 + $0x40] sm:$0xff]
    %v62 = vld [vmem:[#allocation2 + $0x48] sm:$0xff]
    %v63 = vld [vmem:[#allocation2 + $0x50] sm:$0xff]
    %v64 = vld [vmem:[#allocation2 + $0x58] sm:$0xff]
    %v65 = vld [vmem:[#allocation2 + $0x60] sm:$0xff]
    %v66 = vld [vmem:[#allocation2 + $0x68] sm:$0xff]
    %v67 = vld [vmem:[#allocation2 + $0x70] sm:$0xff]
    %v68 = vld [vmem:[#allocation2 + $0x78] sm:$0xff]
    %v69 = vpack.c.bf16 %v54, %v53
    %v70 = vpack.c.bf16 %v56, %v55
    %v71 = vpack.c.bf16 %v58, %v57
    %v72 = vpack.c.bf16 %v60, %v59
    %v73 = vpack.c.bf16 %v62, %v61
    %v74 = vpack.c.bf16 %v64, %v63
    %v75 = vpack.c.bf16 %v66, %v65
    %v76 = vpack.c.bf16 %v68, %v67
    %v77 = vld [vmem:[#allocation5] sm:$0xf]
    %v78 = vld [vmem:[#allocation5 + $0x4] sm:$0xf]
    %v79 = vld [vmem:[#allocation5 + $0x8] sm:$0xf]
    %v80 = vld [vmem:[#allocation5 + $0xc] sm:$0xf]
    %v81 = vld [vmem:[#allocation5 + $0x10] sm:$0xf]
    %v82 = vld [vmem:[#allocation5 + $0x14] sm:$0xf]
    %v83 = vld [vmem:[#allocation5 + $0x18] sm:$0xf]
    %v84 = vld [vmem:[#allocation5 + $0x1c] sm:$0xf]
    %v85 = vld [vmem:[#allocation5 + $0x20] sm:$0xf]
    %v86 = vld [vmem:[#allocation5 + $0x24] sm:$0xf]
    %v87 = vld [vmem:[#allocation5 + $0x28] sm:$0xf]
    %v88 = vld [vmem:[#allocation5 + $0x2c] sm:$0xf]
    %v89 = vld [vmem:[#allocation5 + $0x30] sm:$0xf]
    %v90 = vld [vmem:[#allocation5 + $0x34] sm:$0xf]
    %v91 = vld [vmem:[#allocation5 + $0x38] sm:$0xf]
    %v92 = vld [vmem:[#allocation5 + $0x3c] sm:$0xf]
    %v93 = vld [vmem:[%s2] sm:$0x1]
    %v95 = vperm.slane %v93, 0
    %v113 = vunpack.c.l.b16 %v77
    %v114 = vunpack.c.l.b16 %v78
    %v115 = vunpack.c.l.b16 %v79
    %v116 = vunpack.c.l.b16 %v80
    %v117 = vunpack.c.l.b16 %v81
    %v118 = vunpack.c.l.b16 %v82
    %v119 = vunpack.c.l.b16 %v83
    %v120 = vunpack.c.l.b16 %v84
    %v121 = vunpack.c.l.b16 %v85
    %v122 = vunpack.c.l.b16 %v86
    %v123 = vunpack.c.l.b16 %v87
    %v124 = vunpack.c.l.b16 %v88
    %v125 = vunpack.c.l.b16 %v89
    %v126 = vunpack.c.l.b16 %v90
    %v127 = vunpack.c.l.b16 %v91
    %v128 = vunpack.c.l.b16 %v92
    %v129 = vpack.c.b16 %v114, %v113
    %v130 = vpack.c.b16 %v116, %v115
    %v131 = vpack.c.b16 %v118, %v117
    %v132 = vpack.c.b16 %v120, %v119
    %v133 = vpack.c.b16 %v122, %v121
    %v134 = vpack.c.b16 %v124, %v123
    %v135 = vpack.c.b16 %v126, %v125
    %v136 = vpack.c.b16 %v128, %v127
    %145 = vmatpush.bf16.msra.mxu0 %v136
    %146 = vmatpush.bf16.msra.mxu0 %v135
    %147 = vmatpush.bf16.msra.mxu0 %v134
    %148 = vmatpush.bf16.msra.mxu0 %v133
    %149 = vmatpush.bf16.msra.mxu0 %v132
    %150 = vmatpush.bf16.msra.mxu0 %v131
    %151 = vmatpush.bf16.msra.mxu0 %v130
    %152 = vmatpush.bf16.msra.mxu0 %v129
    %153 = vmatmul.bf16.gmra.mxu0 %v69
    %v154 = vpop.f32.mrf.mxu0
    %v155 = vadd.f32 %v95, %v154
    %v156 = vpop.f32.mrf.mxu0
    %v157 = vadd.f32 %v95, %v156
    %158 = vmatmul.bf16.gmra.mxu0 %v70
    %v159 = vpop.f32.mrf.mxu0
    %v160 = vadd.f32 %v95, %v159
    %v161 = vpop.f32.mrf.mxu0
    %v162 = vadd.f32 %v95, %v161
    %163 = vmatmul.bf16.gmra.mxu0 %v71
    %v164 = vpop.f32.mrf.mxu0
    %v165 = vadd.f32 %v95, %v164
    %v166 = vpop.f32.mrf.mxu0
    %v167 = vadd.f32 %v95, %v166
    %168 = vmatmul.bf16.gmra.mxu0 %v72
    %v169 = vpop.f32.mrf.mxu0
    %v170 = vadd.f32 %v95, %v169
    %v171 = vpop.f32.mrf.mxu0
    %v172 = vadd.f32 %v95, %v171
    %173 = vmatmul.bf16.gmra.mxu0 %v73
    %v174 = vpop.f32.mrf.mxu0
    %v175 = vadd.f32 %v95, %v174
    %v176 = vpop.f32.mrf.mxu0
    %v177 = vadd.f32 %v95, %v176
    %178 = vmatmul.bf16.gmra.mxu0 %v74
    %v179 = vpop.f32.mrf.mxu0
    %v180 = vadd.f32 %v95, %v179
    %v181 = vpop.f32.mrf.mxu0
    %v182 = vadd.f32 %v95, %v181
    %183 = vmatmul.bf16.gmra.mxu0 %v75
    %v184 = vpop.f32.mrf.mxu0
    %v185 = vadd.f32 %v95, %v184
    %v186 = vpop.f32.mrf.mxu0
    %v187 = vadd.f32 %v95, %v186
    %188 = vmatmul.bf16.gmra.mxu0 %v76
    %v189 = vpop.f32.mrf.mxu0
    %v190 = vadd.f32 %v95, %v189
    %v191 = vpop.f32.mrf.mxu0
    %v192 = vadd.f32 %v95, %v191
    %193 = vdwg.mxu0
    %v194 = vmul.f32 %v155, 0.5
    %v195 = vmul.f32 %v157, 0.5
    %v196 = vmul.f32 %v160, 0.5
    %v197 = vmul.f32 %v162, 0.5
    %v198 = vmul.f32 %v165, 0.5
    %v199 = vmul.f32 %v167, 0.5
    %v200 = vmul.f32 %v170, 0.5
    %v201 = vmul.f32 %v172, 0.5
    %v202 = vmul.f32 %v175, 0.5
    %v203 = vmul.f32 %v177, 0.5
    %v204 = vmul.f32 %v180, 0.5
    %v205 = vmul.f32 %v182, 0.5
    %v206 = vmul.f32 %v185, 0.5
    %v207 = vmul.f32 %v187, 0.5
    %v208 = vmul.f32 %v190, 0.5
    %v209 = vmul.f32 %v192, 0.5
    %v210 = vmul.f32 %v155, 0.70710677
    %v211 = vmul.f32 %v157, 0.70710677
    %v212 = vmul.f32 %v160, 0.70710677
    %v213 = vmul.f32 %v162, 0.70710677
    %v214 = vmul.f32 %v165, 0.70710677
    %v215 = vmul.f32 %v167, 0.70710677
    %v216 = vmul.f32 %v170, 0.70710677
    %v217 = vmul.f32 %v172, 0.70710677
    %v218 = vmul.f32 %v175, 0.70710677
    %v219 = vmul.f32 %v177, 0.70710677
    %v220 = vmul.f32 %v180, 0.70710677
    %v221 = vmul.f32 %v182, 0.70710677
    %v222 = vmul.f32 %v185, 0.70710677
    %v223 = vmul.f32 %v187, 0.70710677
    %v224 = vmul.f32 %v190, 0.70710677
    %v225 = vmul.f32 %v192, 0.70710677
    %v226 = vmul.f32 %v210, %v210
    %v227 = vmin.f32 16.0, %v226
    %v228 = vmul.f32 %v227, 2.1237322e-06
    %v229 = vadd.f32 %v228, 0.00028619796
    %v230 = vmul.f32 %v227, %v229
    %v231 = vadd.f32 %v230, 0.0036580483
    %v232 = vmul.f32 %v227, %v231
    %v233 = vadd.f32 %v232, 0.05243302
    %v234 = vmul.f32 %v227, %v233
    %v235 = vadd.f32 %v234, 0.18741608
    %v236 = vmul.f32 %v227, %v235
    %v237 = vadd.f32 %v236, 1.1283791
    %v238 = vmul.f32 %v210, %v237
    %v239 = vmul.f32 %v227, 3.8918573e-05
    %v240 = vadd.f32 %v239, 0.001143296
    %v241 = vmul.f32 %v227, %v240
    %v242 = vadd.f32 %v241, 0.014752088
    %v243 = vmul.f32 %v227, %v242
    %v244 = vadd.f32 %v243, 0.112945676
    %v245 = vmul.f32 %v227, %v244
    %v246 = vadd.f32 %v245, 0.4994258
    %v247 = vmul.f32 %v227, %v246
    %v248 = vadd.f32 %v247, 1.0
    %v249 = vrcp.pop %v248
    %v250 = vmul.f32 %v248, %v249
    %v251 = vsub.f32 1.0, %v250
    %v252 = vmul.f32 %v249, %v251
    %v253 = vadd.f32 %v249, %v252
    %vm254 = vweird.f32 %v248
    %vm255 = vweird.f32 %v249
    %vm256 = vmor %vm254, %vm255
    %v257 = vsel %vm256, %v249, %v253
    %v258 = vand.u32 2147483647, %v248
    %vm259 = vcmp.eq.f32.partialorder %v258, 8.507059e+37
    %v260 = vand.u32 %v248, 2147483648
    %v261 = vor.u32 1.1754944e-38, %v260
    %v262 = vsel %vm259, %v261, %v257
    %v263 = vmul.f32 %v238, %v262
    %v264 = vmin.f32 %v263, 1.0
    %v265 = vmax.f32 %v264, -1.0
    %v266 = vmul.f32 %v211, %v211
    %v267 = vmin.f32 16.0, %v266
    %v268 = vmul.f32 %v267, 2.1237322e-06
    %v269 = vadd.f32 %v268, 0.00028619796
    %v270 = vmul.f32 %v267, %v269
    %v271 = vadd.f32 %v270, 0.0036580483
    %v272 = vmul.f32 %v267, %v271
    %v273 = vadd.f32 %v272, 0.05243302
    %v274 = vmul.f32 %v267, %v273
    %v275 = vadd.f32 %v274, 0.18741608
    %v276 = vmul.f32 %v267, %v275
    %v277 = vadd.f32 %v276, 1.1283791
    %v278 = vmul.f32 %v211, %v277
    %v279 = vmul.f32 %v267, 3.8918573e-05
    %v280 = vadd.f32 %v279, 0.001143296
    %v281 = vmul.f32 %v267, %v280
    %v282 = vadd.f32 %v281, 0.014752088
    %v283 = vmul.f32 %v267, %v282
    %v284 = vadd.f32 %v283, 0.112945676
    %v285 = vmul.f32 %v267, %v284
    %v286 = vadd.f32 %v285, 0.4994258
    %v287 = vmul.f32 %v267, %v286
    %v288 = vadd.f32 %v287, 1.0
    %v289 = vrcp.pop %v288
    %v290 = vmul.f32 %v288, %v289
    %v291 = vsub.f32 1.0, %v290
    %v292 = vmul.f32 %v289, %v291
    %v293 = vadd.f32 %v289, %v292
    %vm294 = vweird.f32 %v288
    %vm295 = vweird.f32 %v289
    %vm296 = vmor %vm294, %vm295
    %v297 = vsel %vm296, %v289, %v293
    %v298 = vand.u32 2147483647, %v288
    %vm299 = vcmp.eq.f32.partialorder %v298, 8.507059e+37
    %v300 = vand.u32 %v288, 2147483648
    %v301 = vor.u32 1.1754944e-38, %v300
    %v302 = vsel %vm299, %v301, %v297
    %v303 = vmul.f32 %v278, %v302
    %v304 = vmin.f32 %v303, 1.0
    %v305 = vmax.f32 %v304, -1.0
    %v306 = vmul.f32 %v212, %v212
    %v307 = vmin.f32 16.0, %v306
    %v308 = vmul.f32 %v307, 2.1237322e-06
    %v309 = vadd.f32 %v308, 0.00028619796
    %v310 = vmul.f32 %v307, %v309
    %v311 = vadd.f32 %v310, 0.0036580483
    %v312 = vmul.f32 %v307, %v311
    %v313 = vadd.f32 %v312, 0.05243302
    %v314 = vmul.f32 %v307, %v313
    %v315 = vadd.f32 %v314, 0.18741608
    %v316 = vmul.f32 %v307, %v315
    %v317 = vadd.f32 %v316, 1.1283791
    %v318 = vmul.f32 %v212, %v317
    %v319 = vmul.f32 %v307, 3.8918573e-05
    %v320 = vadd.f32 %v319, 0.001143296
    %v321 = vmul.f32 %v307, %v320
    %v322 = vadd.f32 %v321, 0.014752088
    %v323 = vmul.f32 %v307, %v322
    %v324 = vadd.f32 %v323, 0.112945676
    %v325 = vmul.f32 %v307, %v324
    %v326 = vadd.f32 %v325, 0.4994258
    %v327 = vmul.f32 %v307, %v326
    %v328 = vadd.f32 %v327, 1.0
    %v329 = vrcp.pop %v328
    %v330 = vmul.f32 %v328, %v329
    %v331 = vsub.f32 1.0, %v330
    %v332 = vmul.f32 %v329, %v331
    %v333 = vadd.f32 %v329, %v332
    %vm334 = vweird.f32 %v328
    %vm335 = vweird.f32 %v329
    %vm336 = vmor %vm334, %vm335
    %v337 = vsel %vm336, %v329, %v333
    %v338 = vand.u32 2147483647, %v328
    %vm339 = vcmp.eq.f32.partialorder %v338, 8.507059e+37
    %v340 = vand.u32 %v328, 2147483648
    %v341 = vor.u32 1.1754944e-38, %v340
    %v342 = vsel %vm339, %v341, %v337
    %v343 = vmul.f32 %v318, %v342
    %v344 = vmin.f32 %v343, 1.0
    %v345 = vmax.f32 %v344, -1.0
    %v346 = vmul.f32 %v213, %v213
    %v347 = vmin.f32 16.0, %v346
    %v348 = vmul.f32 %v347, 2.1237322e-06
    %v349 = vadd.f32 %v348, 0.00028619796
    %v350 = vmul.f32 %v347, %v349
    %v351 = vadd.f32 %v350, 0.0036580483
    %v352 = vmul.f32 %v347, %v351
    %v353 = vadd.f32 %v352, 0.05243302
    %v354 = vmul.f32 %v347, %v353
    %v355 = vadd.f32 %v354, 0.18741608
    %v356 = vmul.f32 %v347, %v355
    %v357 = vadd.f32 %v356, 1.1283791
    %v358 = vmul.f32 %v213, %v357
    %v359 = vmul.f32 %v347, 3.8918573e-05
    %v360 = vadd.f32 %v359, 0.001143296
    %v361 = vmul.f32 %v347, %v360
    %v362 = vadd.f32 %v361, 0.014752088
    %v363 = vmul.f32 %v347, %v362
    %v364 = vadd.f32 %v363, 0.112945676
    %v365 = vmul.f32 %v347, %v364
    %v366 = vadd.f32 %v365, 0.4994258
    %v367 = vmul.f32 %v347, %v366
    %v368 = vadd.f32 %v367, 1.0
    %v369 = vrcp.pop %v368
    %v370 = vmul.f32 %v368, %v369
    %v371 = vsub.f32 1.0, %v370
    %v372 = vmul.f32 %v369, %v371
    %v373 = vadd.f32 %v369, %v372
    %vm374 = vweird.f32 %v368
    %vm375 = vweird.f32 %v369
    %vm376 = vmor %vm374, %vm375
    %v377 = vsel %vm376, %v369, %v373
    %v378 = vand.u32 2147483647, %v368
    %vm379 = vcmp.eq.f32.partialorder %v378, 8.507059e+37
    %v380 = vand.u32 %v368, 2147483648
    %v381 = vor.u32 1.1754944e-38, %v380
    %v382 = vsel %vm379, %v381, %v377
    %v383 = vmul.f32 %v358, %v382
    %v384 = vmin.f32 %v383, 1.0
    %v385 = vmax.f32 %v384, -1.0
    %v386 = vmul.f32 %v214, %v214
    %v387 = vmin.f32 16.0, %v386
    %v388 = vmul.f32 %v387, 2.1237322e-06
    %v389 = vadd.f32 %v388, 0.00028619796
    %v390 = vmul.f32 %v387, %v389
    %v391 = vadd.f32 %v390, 0.0036580483
    %v392 = vmul.f32 %v387, %v391
    %v393 = vadd.f32 %v392, 0.05243302
    %v394 = vmul.f32 %v387, %v393
    %v395 = vadd.f32 %v394, 0.18741608
    %v396 = vmul.f32 %v387, %v395
    %v397 = vadd.f32 %v396, 1.1283791
    %v398 = vmul.f32 %v214, %v397
    %v399 = vmul.f32 %v387, 3.8918573e-05
    %v400 = vadd.f32 %v399, 0.001143296
    %v401 = vmul.f32 %v387, %v400
    %v402 = vadd.f32 %v401, 0.014752088
    %v403 = vmul.f32 %v387, %v402
    %v404 = vadd.f32 %v403, 0.112945676
    %v405 = vmul.f32 %v387, %v404
    %v406 = vadd.f32 %v405, 0.4994258
    %v407 = vmul.f32 %v387, %v406
    %v408 = vadd.f32 %v407, 1.0
    %v409 = vrcp.pop %v408
    %v410 = vmul.f32 %v408, %v409
    %v411 = vsub.f32 1.0, %v410
    %v412 = vmul.f32 %v409, %v411
    %v413 = vadd.f32 %v409, %v412
    %vm414 = vweird.f32 %v408
    %vm415 = vweird.f32 %v409
    %vm416 = vmor %vm414, %vm415
    %v417 = vsel %vm416, %v409, %v413
    %v418 = vand.u32 2147483647, %v408
    %vm419 = vcmp.eq.f32.partialorder %v418, 8.507059e+37
    %v420 = vand.u32 %v408, 2147483648
    %v421 = vor.u32 1.1754944e-38, %v420
    %v422 = vsel %vm419, %v421, %v417
    %v423 = vmul.f32 %v398, %v422
    %v424 = vmin.f32 %v423, 1.0
    %v425 = vmax.f32 %v424, -1.0
    %v426 = vmul.f32 %v215, %v215
    %v427 = vmin.f32 16.0, %v426
    %v428 = vmul.f32 %v427, 2.1237322e-06
    %v429 = vadd.f32 %v428, 0.00028619796
    %v430 = vmul.f32 %v427, %v429
    %v431 = vadd.f32 %v430, 0.0036580483
    %v432 = vmul.f32 %v427, %v431
    %v433 = vadd.f32 %v432, 0.05243302
    %v434 = vmul.f32 %v427, %v433
    %v435 = vadd.f32 %v434, 0.18741608
    %v436 = vmul.f32 %v427, %v435
    %v437 = vadd.f32 %v436, 1.1283791
    %v438 = vmul.f32 %v215, %v437
    %v439 = vmul.f32 %v427, 3.8918573e-05
    %v440 = vadd.f32 %v439, 0.001143296
    %v441 = vmul.f32 %v427, %v440
    %v442 = vadd.f32 %v441, 0.014752088
    %v443 = vmul.f32 %v427, %v442
    %v444 = vadd.f32 %v443, 0.112945676
    %v445 = vmul.f32 %v427, %v444
    %v446 = vadd.f32 %v445, 0.4994258
    %v447 = vmul.f32 %v427, %v446
    %v448 = vadd.f32 %v447, 1.0
    %v449 = vrcp.pop %v448
    %v450 = vmul.f32 %v448, %v449
    %v451 = vsub.f32 1.0, %v450
    %v452 = vmul.f32 %v449, %v451
    %v453 = vadd.f32 %v449, %v452
    %vm454 = vweird.f32 %v448
    %vm455 = vweird.f32 %v449
    %vm456 = vmor %vm454, %vm455
    %v457 = vsel %vm456, %v449, %v453
    %v458 = vand.u32 2147483647, %v448
    %vm459 = vcmp.eq.f32.partialorder %v458, 8.507059e+37
    %v460 = vand.u32 %v448, 2147483648
    %v461 = vor.u32 1.1754944e-38, %v460
    %v462 = vsel %vm459, %v461, %v457
    %v463 = vmul.f32 %v438, %v462
    %v464 = vmin.f32 %v463, 1.0
    %v465 = vmax.f32 %v464, -1.0
    %v466 = vmul.f32 %v216, %v216
    %v467 = vmin.f32 16.0, %v466
    %v468 = vmul.f32 %v467, 2.1237322e-06
    %v469 = vadd.f32 %v468, 0.00028619796
    %v470 = vmul.f32 %v467, %v469
    %v471 = vadd.f32 %v470, 0.0036580483
    %v472 = vmul.f32 %v467, %v471
    %v473 = vadd.f32 %v472, 0.05243302
    %v474 = vmul.f32 %v467, %v473
    %v475 = vadd.f32 %v474, 0.18741608
    %v476 = vmul.f32 %v467, %v475
    %v477 = vadd.f32 %v476, 1.1283791
    %v478 = vmul.f32 %v216, %v477
    %v479 = vmul.f32 %v467, 3.8918573e-05
    %v480 = vadd.f32 %v479, 0.001143296
    %v481 = vmul.f32 %v467, %v480
    %v482 = vadd.f32 %v481, 0.014752088
    %v483 = vmul.f32 %v467, %v482
    %v484 = vadd.f32 %v483, 0.112945676
    %v485 = vmul.f32 %v467, %v484
    %v486 = vadd.f32 %v485, 0.4994258
    %v487 = vmul.f32 %v467, %v486
    %v488 = vadd.f32 %v487, 1.0
    %v489 = vrcp.pop %v488
    %v490 = vmul.f32 %v488, %v489
    %v491 = vsub.f32 1.0, %v490
    %v492 = vmul.f32 %v489, %v491
    %v493 = vadd.f32 %v489, %v492
    %vm494 = vweird.f32 %v488
    %vm495 = vweird.f32 %v489
    %vm496 = vmor %vm494, %vm495
    %v497 = vsel %vm496, %v489, %v493
    %v498 = vand.u32 2147483647, %v488
    %vm499 = vcmp.eq.f32.partialorder %v498, 8.507059e+37
    %v500 = vand.u32 %v488, 2147483648
    %v501 = vor.u32 1.1754944e-38, %v500
    %v502 = vsel %vm499, %v501, %v497
    %v503 = vmul.f32 %v478, %v502
    %v504 = vmin.f32 %v503, 1.0
    %v505 = vmax.f32 %v504, -1.0
    %v506 = vmul.f32 %v217, %v217
    %v507 = vmin.f32 16.0, %v506
    %v508 = vmul.f32 %v507, 2.1237322e-06
    %v509 = vadd.f32 %v508, 0.00028619796
    %v510 = vmul.f32 %v507, %v509
    %v511 = vadd.f32 %v510, 0.0036580483
    %v512 = vmul.f32 %v507, %v511
    %v513 = vadd.f32 %v512, 0.05243302
    %v514 = vmul.f32 %v507, %v513
    %v515 = vadd.f32 %v514, 0.18741608
    %v516 = vmul.f32 %v507, %v515
    %v517 = vadd.f32 %v516, 1.1283791
    %v518 = vmul.f32 %v217, %v517
    %v519 = vmul.f32 %v507, 3.8918573e-05
    %v520 = vadd.f32 %v519, 0.001143296
    %v521 = vmul.f32 %v507, %v520
    %v522 = vadd.f32 %v521, 0.014752088
    %v523 = vmul.f32 %v507, %v522
    %v524 = vadd.f32 %v523, 0.112945676
    %v525 = vmul.f32 %v507, %v524
    %v526 = vadd.f32 %v525, 0.4994258
    %v527 = vmul.f32 %v507, %v526
    %v528 = vadd.f32 %v527, 1.0
    %v529 = vrcp.pop %v528
    %v530 = vmul.f32 %v528, %v529
    %v531 = vsub.f32 1.0, %v530
    %v532 = vmul.f32 %v529, %v531
    %v533 = vadd.f32 %v529, %v532
    %vm534 = vweird.f32 %v528
    %vm535 = vweird.f32 %v529
    %vm536 = vmor %vm534, %vm535
    %v537 = vsel %vm536, %v529, %v533
    %v538 = vand.u32 2147483647, %v528
    %vm539 = vcmp.eq.f32.partialorder %v538, 8.507059e+37
    %v540 = vand.u32 %v528, 2147483648
    %v541 = vor.u32 1.1754944e-38, %v540
    %v542 = vsel %vm539, %v541, %v537
    %v543 = vmul.f32 %v518, %v542
    %v544 = vmin.f32 %v543, 1.0
    %v545 = vmax.f32 %v544, -1.0
    %v546 = vmul.f32 %v218, %v218
    %v547 = vmin.f32 16.0, %v546
    %v548 = vmul.f32 %v547, 2.1237322e-06
    %v549 = vadd.f32 %v548, 0.00028619796
    %v550 = vmul.f32 %v547, %v549
    %v551 = vadd.f32 %v550, 0.0036580483
    %v552 = vmul.f32 %v547, %v551
    %v553 = vadd.f32 %v552, 0.05243302
    %v554 = vmul.f32 %v547, %v553
    %v555 = vadd.f32 %v554, 0.18741608
    %v556 = vmul.f32 %v547, %v555
    %v557 = vadd.f32 %v556, 1.1283791
    %v558 = vmul.f32 %v218, %v557
    %v559 = vmul.f32 %v547, 3.8918573e-05
    %v560 = vadd.f32 %v559, 0.001143296
    %v561 = vmul.f32 %v547, %v560
    %v562 = vadd.f32 %v561, 0.014752088
    %v563 = vmul.f32 %v547, %v562
    %v564 = vadd.f32 %v563, 0.112945676
    %v565 = vmul.f32 %v547, %v564
    %v566 = vadd.f32 %v565, 0.4994258
    %v567 = vmul.f32 %v547, %v566
    %v568 = vadd.f32 %v567, 1.0
    %v569 = vrcp.pop %v568
    %v570 = vmul.f32 %v568, %v569
    %v571 = vsub.f32 1.0, %v570
    %v572 = vmul.f32 %v569, %v571
    %v573 = vadd.f32 %v569, %v572
    %vm574 = vweird.f32 %v568
    %vm575 = vweird.f32 %v569
    %vm576 = vmor %vm574, %vm575
    %v577 = vsel %vm576, %v569, %v573
    %v578 = vand.u32 2147483647, %v568
    %vm579 = vcmp.eq.f32.partialorder %v578, 8.507059e+37
    %v580 = vand.u32 %v568, 2147483648
    %v581 = vor.u32 1.1754944e-38, %v580
    %v582 = vsel %vm579, %v581, %v577
    %v583 = vmul.f32 %v558, %v582
    %v584 = vmin.f32 %v583, 1.0
    %v585 = vmax.f32 %v584, -1.0
    %v586 = vmul.f32 %v219, %v219
    %v587 = vmin.f32 16.0, %v586
    %v588 = vmul.f32 %v587, 2.1237322e-06
    %v589 = vadd.f32 %v588, 0.00028619796
    %v590 = vmul.f32 %v587, %v589
    %v591 = vadd.f32 %v590, 0.0036580483
    %v592 = vmul.f32 %v587, %v591
    %v593 = vadd.f32 %v592, 0.05243302
    %v594 = vmul.f32 %v587, %v593
    %v595 = vadd.f32 %v594, 0.18741608
    %v596 = vmul.f32 %v587, %v595
    %v597 = vadd.f32 %v596, 1.1283791
    %v598 = vmul.f32 %v219, %v597
    %v599 = vmul.f32 %v587, 3.8918573e-05
    %v600 = vadd.f32 %v599, 0.001143296
    %v601 = vmul.f32 %v587, %v600
    %v602 = vadd.f32 %v601, 0.014752088
    %v603 = vmul.f32 %v587, %v602
    %v604 = vadd.f32 %v603, 0.112945676
    %v605 = vmul.f32 %v587, %v604
    %v606 = vadd.f32 %v605, 0.4994258
    %v607 = vmul.f32 %v587, %v606
    %v608 = vadd.f32 %v607, 1.0
    %v609 = vrcp.pop %v608
    %v610 = vmul.f32 %v608, %v609
    %v611 = vsub.f32 1.0, %v610
    %v612 = vmul.f32 %v609, %v611
    %v613 = vadd.f32 %v609, %v612
    %vm614 = vweird.f32 %v608
    %vm615 = vweird.f32 %v609
    %vm616 = vmor %vm614, %vm615
    %v617 = vsel %vm616, %v609, %v613
    %v618 = vand.u32 2147483647, %v608
    %vm619 = vcmp.eq.f32.partialorder %v618, 8.507059e+37
    %v620 = vand.u32 %v608, 2147483648
    %v621 = vor.u32 1.1754944e-38, %v620
    %v622 = vsel %vm619, %v621, %v617
    %v623 = vmul.f32 %v598, %v622
    %v624 = vmin.f32 %v623, 1.0
    %v625 = vmax.f32 %v624, -1.0
    %v626 = vmul.f32 %v220, %v220
    %v627 = vmin.f32 16.0, %v626
    %v628 = vmul.f32 %v627, 2.1237322e-06
    %v629 = vadd.f32 %v628, 0.00028619796
    %v630 = vmul.f32 %v627, %v629
    %v631 = vadd.f32 %v630, 0.0036580483
    %v632 = vmul.f32 %v627, %v631
    %v633 = vadd.f32 %v632, 0.05243302
    %v634 = vmul.f32 %v627, %v633
    %v635 = vadd.f32 %v634, 0.18741608
    %v636 = vmul.f32 %v627, %v635
    %v637 = vadd.f32 %v636, 1.1283791
    %v638 = vmul.f32 %v220, %v637
    %v639 = vmul.f32 %v627, 3.8918573e-05
    %v640 = vadd.f32 %v639, 0.001143296
    %v641 = vmul.f32 %v627, %v640
    %v642 = vadd.f32 %v641, 0.014752088
    %v643 = vmul.f32 %v627, %v642
    %v644 = vadd.f32 %v643, 0.112945676
    %v645 = vmul.f32 %v627, %v644
    %v646 = vadd.f32 %v645, 0.4994258
    %v647 = vmul.f32 %v627, %v646
    %v648 = vadd.f32 %v647, 1.0
    %v649 = vrcp.pop %v648
    %v650 = vmul.f32 %v648, %v649
    %v651 = vsub.f32 1.0, %v650
    %v652 = vmul.f32 %v649, %v651
    %v653 = vadd.f32 %v649, %v652
    %vm654 = vweird.f32 %v648
    %vm655 = vweird.f32 %v649
    %vm656 = vmor %vm654, %vm655
    %v657 = vsel %vm656, %v649, %v653
    %v658 = vand.u32 2147483647, %v648
    %vm659 = vcmp.eq.f32.partialorder %v658, 8.507059e+37
    %v660 = vand.u32 %v648, 2147483648
    %v661 = vor.u32 1.1754944e-38, %v660
    %v662 = vsel %vm659, %v661, %v657
    %v663 = vmul.f32 %v638, %v662
    %v664 = vmin.f32 %v663, 1.0
    %v665 = vmax.f32 %v664, -1.0
    %v666 = vmul.f32 %v221, %v221
    %v667 = vmin.f32 16.0, %v666
    %v668 = vmul.f32 %v667, 2.1237322e-06
    %v669 = vadd.f32 %v668, 0.00028619796
    %v670 = vmul.f32 %v667, %v669
    %v671 = vadd.f32 %v670, 0.0036580483
    %v672 = vmul.f32 %v667, %v671
    %v673 = vadd.f32 %v672, 0.05243302
    %v674 = vmul.f32 %v667, %v673
    %v675 = vadd.f32 %v674, 0.18741608
    %v676 = vmul.f32 %v667, %v675
    %v677 = vadd.f32 %v676, 1.1283791
    %v678 = vmul.f32 %v221, %v677
    %v679 = vmul.f32 %v667, 3.8918573e-05
    %v680 = vadd.f32 %v679, 0.001143296
    %v681 = vmul.f32 %v667, %v680
    %v682 = vadd.f32 %v681, 0.014752088
    %v683 = vmul.f32 %v667, %v682
    %v684 = vadd.f32 %v683, 0.112945676
    %v685 = vmul.f32 %v667, %v684
    %v686 = vadd.f32 %v685, 0.4994258
    %v687 = vmul.f32 %v667, %v686
    %v688 = vadd.f32 %v687, 1.0
    %v689 = vrcp.pop %v688
    %v690 = vmul.f32 %v688, %v689
    %v691 = vsub.f32 1.0, %v690
    %v692 = vmul.f32 %v689, %v691
    %v693 = vadd.f32 %v689, %v692
    %vm694 = vweird.f32 %v688
    %vm695 = vweird.f32 %v689
    %vm696 = vmor %vm694, %vm695
    %v697 = vsel %vm696, %v689, %v693
    %v698 = vand.u32 2147483647, %v688
    %vm699 = vcmp.eq.f32.partialorder %v698, 8.507059e+37
    %v700 = vand.u32 %v688, 2147483648
    %v701 = vor.u32 1.1754944e-38, %v700
    %v702 = vsel %vm699, %v701, %v697
    %v703 = vmul.f32 %v678, %v702
    %v704 = vmin.f32 %v703, 1.0
    %v705 = vmax.f32 %v704, -1.0
    %v706 = vmul.f32 %v222, %v222
    %v707 = vmin.f32 16.0, %v706
    %v708 = vmul.f32 %v707, 2.1237322e-06
    %v709 = vadd.f32 %v708, 0.00028619796
    %v710 = vmul.f32 %v707, %v709
    %v711 = vadd.f32 %v710, 0.0036580483
    %v712 = vmul.f32 %v707, %v711
    %v713 = vadd.f32 %v712, 0.05243302
    %v714 = vmul.f32 %v707, %v713
    %v715 = vadd.f32 %v714, 0.18741608
    %v716 = vmul.f32 %v707, %v715
    %v717 = vadd.f32 %v716, 1.1283791
    %v718 = vmul.f32 %v222, %v717
    %v719 = vmul.f32 %v707, 3.8918573e-05
    %v720 = vadd.f32 %v719, 0.001143296
    %v721 = vmul.f32 %v707, %v720
    %v722 = vadd.f32 %v721, 0.014752088
    %v723 = vmul.f32 %v707, %v722
    %v724 = vadd.f32 %v723, 0.112945676
    %v725 = vmul.f32 %v707, %v724
    %v726 = vadd.f32 %v725, 0.4994258
    %v727 = vmul.f32 %v707, %v726
    %v728 = vadd.f32 %v727, 1.0
    %v729 = vrcp.pop %v728
    %v730 = vmul.f32 %v728, %v729
    %v731 = vsub.f32 1.0, %v730
    %v732 = vmul.f32 %v729, %v731
    %v733 = vadd.f32 %v729, %v732
    %vm734 = vweird.f32 %v728
    %vm735 = vweird.f32 %v729
    %vm736 = vmor %vm734, %vm735
    %v737 = vsel %vm736, %v729, %v733
    %v738 = vand.u32 2147483647, %v728
    %vm739 = vcmp.eq.f32.partialorder %v738, 8.507059e+37
    %v740 = vand.u32 %v728, 2147483648
    %v741 = vor.u32 1.1754944e-38, %v740
    %v742 = vsel %vm739, %v741, %v737
    %v743 = vmul.f32 %v718, %v742
    %v744 = vmin.f32 %v743, 1.0
    %v745 = vmax.f32 %v744, -1.0
    %v746 = vmul.f32 %v223, %v223
    %v747 = vmin.f32 16.0, %v746
    %v748 = vmul.f32 %v747, 2.1237322e-06
    %v749 = vadd.f32 %v748, 0.00028619796
    %v750 = vmul.f32 %v747, %v749
    %v751 = vadd.f32 %v750, 0.0036580483
    %v752 = vmul.f32 %v747, %v751
    %v753 = vadd.f32 %v752, 0.05243302
    %v754 = vmul.f32 %v747, %v753
    %v755 = vadd.f32 %v754, 0.18741608
    %v756 = vmul.f32 %v747, %v755
    %v757 = vadd.f32 %v756, 1.1283791
    %v758 = vmul.f32 %v223, %v757
    %v759 = vmul.f32 %v747, 3.8918573e-05
    %v760 = vadd.f32 %v759, 0.001143296
    %v761 = vmul.f32 %v747, %v760
    %v762 = vadd.f32 %v761, 0.014752088
    %v763 = vmul.f32 %v747, %v762
    %v764 = vadd.f32 %v763, 0.112945676
    %v765 = vmul.f32 %v747, %v764
    %v766 = vadd.f32 %v765, 0.4994258
    %v767 = vmul.f32 %v747, %v766
    %v768 = vadd.f32 %v767, 1.0
    %v769 = vrcp.pop %v768
    %v770 = vmul.f32 %v768, %v769
    %v771 = vsub.f32 1.0, %v770
    %v772 = vmul.f32 %v769, %v771
    %v773 = vadd.f32 %v769, %v772
    %vm774 = vweird.f32 %v768
    %vm775 = vweird.f32 %v769
    %vm776 = vmor %vm774, %vm775
    %v777 = vsel %vm776, %v769, %v773
    %v778 = vand.u32 2147483647, %v768
    %vm779 = vcmp.eq.f32.partialorder %v778, 8.507059e+37
    %v780 = vand.u32 %v768, 2147483648
    %v781 = vor.u32 1.1754944e-38, %v780
    %v782 = vsel %vm779, %v781, %v777
    %v783 = vmul.f32 %v758, %v782
    %v784 = vmin.f32 %v783, 1.0
    %v785 = vmax.f32 %v784, -1.0
    %v786 = vmul.f32 %v224, %v224
    %v787 = vmin.f32 16.0, %v786
    %v788 = vmul.f32 %v787, 2.1237322e-06
    %v789 = vadd.f32 %v788, 0.00028619796
    %v790 = vmul.f32 %v787, %v789
    %v791 = vadd.f32 %v790, 0.0036580483
    %v792 = vmul.f32 %v787, %v791
    %v793 = vadd.f32 %v792, 0.05243302
    %v794 = vmul.f32 %v787, %v793
    %v795 = vadd.f32 %v794, 0.18741608
    %v796 = vmul.f32 %v787, %v795
    %v797 = vadd.f32 %v796, 1.1283791
    %v798 = vmul.f32 %v224, %v797
    %v799 = vmul.f32 %v787, 3.8918573e-05
    %v800 = vadd.f32 %v799, 0.001143296
    %v801 = vmul.f32 %v787, %v800
    %v802 = vadd.f32 %v801, 0.014752088
    %v803 = vmul.f32 %v787, %v802
    %v804 = vadd.f32 %v803, 0.112945676
    %v805 = vmul.f32 %v787, %v804
    %v806 = vadd.f32 %v805, 0.4994258
    %v807 = vmul.f32 %v787, %v806
    %v808 = vadd.f32 %v807, 1.0
    %v809 = vrcp.pop %v808
    %v810 = vmul.f32 %v808, %v809
    %v811 = vsub.f32 1.0, %v810
    %v812 = vmul.f32 %v809, %v811
    %v813 = vadd.f32 %v809, %v812
    %vm814 = vweird.f32 %v808
    %vm815 = vweird.f32 %v809
    %vm816 = vmor %vm814, %vm815
    %v817 = vsel %vm816, %v809, %v813
    %v818 = vand.u32 2147483647, %v808
    %vm819 = vcmp.eq.f32.partialorder %v818, 8.507059e+37
    %v820 = vand.u32 %v808, 2147483648
    %v821 = vor.u32 1.1754944e-38, %v820
    %v822 = vsel %vm819, %v821, %v817
    %v823 = vmul.f32 %v798, %v822
    %v824 = vmin.f32 %v823, 1.0
    %v825 = vmax.f32 %v824, -1.0
    %v826 = vmul.f32 %v225, %v225
    %v827 = vmin.f32 16.0, %v826
    %v828 = vmul.f32 %v827, 2.1237322e-06
    %v829 = vadd.f32 %v828, 0.00028619796
    %v830 = vmul.f32 %v827, %v829
    %v831 = vadd.f32 %v830, 0.0036580483
    %v832 = vmul.f32 %v827, %v831
    %v833 = vadd.f32 %v832, 0.05243302
    %v834 = vmul.f32 %v827, %v833
    %v835 = vadd.f32 %v834, 0.18741608
    %v836 = vmul.f32 %v827, %v835
    %v837 = vadd.f32 %v836, 1.1283791
    %v838 = vmul.f32 %v225, %v837
    %v839 = vmul.f32 %v827, 3.8918573e-05
    %v840 = vadd.f32 %v839, 0.001143296
    %v841 = vmul.f32 %v827, %v840
    %v842 = vadd.f32 %v841, 0.014752088
    %v843 = vmul.f32 %v827, %v842
    %v844 = vadd.f32 %v843, 0.112945676
    %v845 = vmul.f32 %v827, %v844
    %v846 = vadd.f32 %v845, 0.4994258
    %v847 = vmul.f32 %v827, %v846
    %v848 = vadd.f32 %v847, 1.0
    %v849 = vrcp.pop %v848
    %v850 = vmul.f32 %v848, %v849
    %v851 = vsub.f32 1.0, %v850
    %v852 = vmul.f32 %v849, %v851
    %v853 = vadd.f32 %v849, %v852
    %vm854 = vweird.f32 %v848
    %vm855 = vweird.f32 %v849
    %vm856 = vmor %vm854, %vm855
    %v857 = vsel %vm856, %v849, %v853
    %v858 = vand.u32 2147483647, %v848
    %vm859 = vcmp.eq.f32.partialorder %v858, 8.507059e+37
    %v860 = vand.u32 %v848, 2147483648
    %v861 = vor.u32 1.1754944e-38, %v860
    %v862 = vsel %vm859, %v861, %v857
    %v863 = vmul.f32 %v838, %v862
    %v864 = vmin.f32 %v863, 1.0
    %v865 = vmax.f32 %v864, -1.0
    %v866 = vadd.f32 %v265, 1.0
    %v867 = vadd.f32 %v305, 1.0
    %v868 = vadd.f32 %v345, 1.0
    %v869 = vadd.f32 %v385, 1.0
    %v870 = vadd.f32 %v425, 1.0
    %v871 = vadd.f32 %v465, 1.0
    %v872 = vadd.f32 %v505, 1.0
    %v873 = vadd.f32 %v545, 1.0
    %v874 = vadd.f32 %v585, 1.0
    %v875 = vadd.f32 %v625, 1.0
    %v876 = vadd.f32 %v665, 1.0
    %v877 = vadd.f32 %v705, 1.0
    %v878 = vadd.f32 %v745, 1.0
    %v879 = vadd.f32 %v785, 1.0
    %v880 = vadd.f32 %v825, 1.0
    %v881 = vadd.f32 %v865, 1.0
    %v882 = vmul.f32 %v194, %v866
    %v883 = vmul.f32 %v195, %v867
    %v884 = vmul.f32 %v196, %v868
    %v885 = vmul.f32 %v197, %v869
    %v886 = vmul.f32 %v198, %v870
    %v887 = vmul.f32 %v199, %v871
    %v888 = vmul.f32 %v200, %v872
    %v889 = vmul.f32 %v201, %v873
    %v890 = vmul.f32 %v202, %v874
    %v891 = vmul.f32 %v203, %v875
    %v892 = vmul.f32 %v204, %v876
    %v893 = vmul.f32 %v205, %v877
    %v894 = vmul.f32 %v206, %v878
    %v895 = vmul.f32 %v207, %v879
    %v896 = vmul.f32 %v208, %v880
    %v897 = vmul.f32 %v209, %v881
    %898 = vadd.xlane.f32.xlu0 %v882
    %v899 = vpop.xlane.xlu0 %898
    %900 = vadd.xlane.f32.xlu0 %v883
    %v901 = vpop.xlane.xlu0 %900
    %902 = vadd.xlane.f32.xlu0 %v884
    %v903 = vpop.xlane.xlu0 %902
    %904 = vadd.xlane.f32.xlu0 %v885
    %v905 = vpop.xlane.xlu0 %904
    %906 = vadd.xlane.f32.xlu0 %v886
    %v907 = vpop.xlane.xlu0 %906
    %908 = vadd.xlane.f32.xlu0 %v887
    %v909 = vpop.xlane.xlu0 %908
    %910 = vadd.xlane.f32.xlu0 %v888
    %v911 = vpop.xlane.xlu0 %910
    %912 = vadd.xlane.f32.xlu0 %v889
    %v913 = vpop.xlane.xlu0 %912
    %914 = vadd.xlane.f32.xlu0 %v890
    %v915 = vpop.xlane.xlu0 %914
    %916 = vadd.xlane.f32.xlu0 %v891
    %v917 = vpop.xlane.xlu0 %916
    %918 = vadd.xlane.f32.xlu0 %v892
    %v919 = vpop.xlane.xlu0 %918
    %920 = vadd.xlane.f32.xlu0 %v893
    %v921 = vpop.xlane.xlu0 %920
    %922 = vadd.xlane.f32.xlu0 %v894
    %v923 = vpop.xlane.xlu0 %922
    %924 = vadd.xlane.f32.xlu0 %v895
    %v925 = vpop.xlane.xlu0 %924
    %926 = vadd.xlane.f32.xlu0 %v896
    %v927 = vpop.xlane.xlu0 %926
    %928 = vadd.xlane.f32.xlu0 %v897
    %v929 = vpop.xlane.xlu0 %928
    %v930 = vrcp.pop 128.0
    %v931 = vmul.f32 128.0, %v930
    %v932 = vsub.f32 1.0, %v931
    %v933 = vmul.f32 %v930, %v932
    %v934 = vadd.f32 %v930, %v933
    %vm935 = vweird.f32 %v930
    %v936 = vsel %vm935, %v930, %v934
    %v937 = vmul.f32 %v899, %v936
    %v938 = vmul.f32 %v901, %v936
    %v939 = vmul.f32 %v903, %v936
    %v940 = vmul.f32 %v905, %v936
    %v941 = vmul.f32 %v907, %v936
    %v942 = vmul.f32 %v909, %v936
    %v943 = vmul.f32 %v911, %v936
    %v944 = vmul.f32 %v913, %v936
    %v945 = vmul.f32 %v915, %v936
    %v946 = vmul.f32 %v917, %v936
    %v947 = vmul.f32 %v919, %v936
    %v948 = vmul.f32 %v921, %v936
    %v949 = vmul.f32 %v923, %v936
    %v950 = vmul.f32 %v925, %v936
    %v951 = vmul.f32 %v927, %v936
    %v952 = vmul.f32 %v929, %v936
    %v953 = vsub.f32 %v882, %v937
    %v954 = vsub.f32 %v883, %v938
    %v955 = vsub.f32 %v884, %v939
    %v956 = vsub.f32 %v885, %v940
    %v957 = vsub.f32 %v886, %v941
    %v958 = vsub.f32 %v887, %v942
    %v959 = vsub.f32 %v888, %v943
    %v960 = vsub.f32 %v889, %v944
    %v961 = vsub.f32 %v890, %v945
    %v962 = vsub.f32 %v891, %v946
    %v963 = vsub.f32 %v892, %v947
    %v964 = vsub.f32 %v893, %v948
    %v965 = vsub.f32 %v894, %v949
    %v966 = vsub.f32 %v895, %v950
    %v967 = vsub.f32 %v896, %v951
    %v968 = vsub.f32 %v897, %v952
    %v969 = vmul.f32 %v953, %v953
    %v970 = vmul.f32 %v954, %v954
    %v971 = vmul.f32 %v955, %v955
    %v972 = vmul.f32 %v956, %v956
    %v973 = vmul.f32 %v957, %v957
    %v974 = vmul.f32 %v958, %v958
    %v975 = vmul.f32 %v959, %v959
    %v976 = vmul.f32 %v960, %v960
    %v977 = vmul.f32 %v961, %v961
    %v978 = vmul.f32 %v962, %v962
    %v979 = vmul.f32 %v963, %v963
    %v980 = vmul.f32 %v964, %v964
    %v981 = vmul.f32 %v965, %v965
    %v982 = vmul.f32 %v966, %v966
    %v983 = vmul.f32 %v967, %v967
    %v984 = vmul.f32 %v968, %v968
    %985 = vadd.xlane.f32.xlu0 %v969
    %v986 = vpop.xlane.xlu0 %985
    %987 = vadd.xlane.f32.xlu0 %v970
    %v988 = vpop.xlane.xlu0 %987
    %989 = vadd.xlane.f32.xlu0 %v971
    %v990 = vpop.xlane.xlu0 %989
    %991 = vadd.xlane.f32.xlu0 %v972
    %v992 = vpop.xlane.xlu0 %991
    %993 = vadd.xlane.f32.xlu0 %v973
    %v994 = vpop.xlane.xlu0 %993
    %995 = vadd.xlane.f32.xlu0 %v974
    %v996 = vpop.xlane.xlu0 %995
    %997 = vadd.xlane.f32.xlu0 %v975
    %v998 = vpop.xlane.xlu0 %997
    %999 = vadd.xlane.f32.xlu0 %v976
    %v1000 = vpop.xlane.xlu0 %999
    %1001 = vadd.xlane.f32.xlu0 %v977
    %v1002 = vpop.xlane.xlu0 %1001
    %1003 = vadd.xlane.f32.xlu0 %v978
    %v1004 = vpop.xlane.xlu0 %1003
    %1005 = vadd.xlane.f32.xlu0 %v979
    %v1006 = vpop.xlane.xlu0 %1005
    %1007 = vadd.xlane.f32.xlu0 %v980
    %v1008 = vpop.xlane.xlu0 %1007
    %1009 = vadd.xlane.f32.xlu0 %v981
    %v1010 = vpop.xlane.xlu0 %1009
    %1011 = vadd.xlane.f32.xlu0 %v982
    %v1012 = vpop.xlane.xlu0 %1011
    %1013 = vadd.xlane.f32.xlu0 %v983
    %v1014 = vpop.xlane.xlu0 %1013
    %1015 = vadd.xlane.f32.xlu0 %v984
    %v1016 = vpop.xlane.xlu0 %1015
    %v1017 = vmul.f32 %v986, %v936
    %v1018 = vmul.f32 %v988, %v936
    %v1019 = vmul.f32 %v990, %v936
    %v1020 = vmul.f32 %v992, %v936
    %v1021 = vmul.f32 %v994, %v936
    %v1022 = vmul.f32 %v996, %v936
    %v1023 = vmul.f32 %v998, %v936
    %v1024 = vmul.f32 %v1000, %v936
    %v1025 = vmul.f32 %v1002, %v936
    %v1026 = vmul.f32 %v1004, %v936
    %v1027 = vmul.f32 %v1006, %v936
    %v1028 = vmul.f32 %v1008, %v936
    %v1029 = vmul.f32 %v1010, %v936
    %v1030 = vmul.f32 %v1012, %v936
    %v1031 = vmul.f32 %v1014, %v936
    %v1032 = vmul.f32 %v1016, %v936
    %v1033 = vadd.f32 %v1017, 1e-12
    %v1034 = vadd.f32 %v1018, 1e-12
    %v1035 = vadd.f32 %v1019, 1e-12
    %v1036 = vadd.f32 %v1020, 1e-12
    %v1037 = vadd.f32 %v1021, 1e-12
    %v1038 = vadd.f32 %v1022, 1e-12
    %v1039 = vadd.f32 %v1023, 1e-12
    %v1040 = vadd.f32 %v1024, 1e-12
    %v1041 = vadd.f32 %v1025, 1e-12
    %v1042 = vadd.f32 %v1026, 1e-12
    %v1043 = vadd.f32 %v1027, 1e-12
    %v1044 = vadd.f32 %v1028, 1e-12
    %v1045 = vadd.f32 %v1029, 1e-12
    %v1046 = vadd.f32 %v1030, 1e-12
    %v1047 = vadd.f32 %v1031, 1e-12
    %v1048 = vadd.f32 %v1032, 1e-12
    %v1049 = vrsqrt.pop %v1033
    %v1050 = vmul.f32 %v1049, %v1033
    %v1051 = vmul.f32 %v1050, %v1049
    %v1052 = vmul.f32 0.5, %v1051
    %v1053 = vsub.f32 1.5, %v1052
    %v1054 = vmul.f32 %v1049, %v1053
    %vm1055 = vweird.f32 %v1033
    %vm1056 = vweird.f32 %v1049
    %vm1057 = vmor %vm1055, %vm1056
    %v1058 = vsel %vm1057, %v1049, %v1054
    %v1059 = vrsqrt.pop %v1034
    %v1060 = vmul.f32 %v1059, %v1034
    %v1061 = vmul.f32 %v1060, %v1059
    %v1062 = vmul.f32 0.5, %v1061
    %v1063 = vsub.f32 1.5, %v1062
    %v1064 = vmul.f32 %v1059, %v1063
    %vm1065 = vweird.f32 %v1034
    %vm1066 = vweird.f32 %v1059
    %vm1067 = vmor %vm1065, %vm1066
    %v1068 = vsel %vm1067, %v1059, %v1064
    %v1069 = vrsqrt.pop %v1035
    %v1070 = vmul.f32 %v1069, %v1035
    %v1071 = vmul.f32 %v1070, %v1069
    %v1072 = vmul.f32 0.5, %v1071
    %v1073 = vsub.f32 1.5, %v1072
    %v1074 = vmul.f32 %v1069, %v1073
    %vm1075 = vweird.f32 %v1035
    %vm1076 = vweird.f32 %v1069
    %vm1077 = vmor %vm1075, %vm1076
    %v1078 = vsel %vm1077, %v1069, %v1074
    %v1079 = vrsqrt.pop %v1036
    %v1080 = vmul.f32 %v1079, %v1036
    %v1081 = vmul.f32 %v1080, %v1079
    %v1082 = vmul.f32 0.5, %v1081
    %v1083 = vsub.f32 1.5, %v1082
    %v1084 = vmul.f32 %v1079, %v1083
    %vm1085 = vweird.f32 %v1036
    %vm1086 = vweird.f32 %v1079
    %vm1087 = vmor %vm1085, %vm1086
    %v1088 = vsel %vm1087, %v1079, %v1084
    %v1089 = vrsqrt.pop %v1037
    %v1090 = vmul.f32 %v1089, %v1037
    %v1091 = vmul.f32 %v1090, %v1089
    %v1092 = vmul.f32 0.5, %v1091
    %v1093 = vsub.f32 1.5, %v1092
    %v1094 = vmul.f32 %v1089, %v1093
    %vm1095 = vweird.f32 %v1037
    %vm1096 = vweird.f32 %v1089
    %vm1097 = vmor %vm1095, %vm1096
    %v1098 = vsel %vm1097, %v1089, %v1094
    %v1099 = vrsqrt.pop %v1038
    %v1100 = vmul.f32 %v1099, %v1038
    %v1101 = vmul.f32 %v1100, %v1099
    %v1102 = vmul.f32 0.5, %v1101
    %v1103 = vsub.f32 1.5, %v1102
    %v1104 = vmul.f32 %v1099, %v1103
    %vm1105 = vweird.f32 %v1038
    %vm1106 = vweird.f32 %v1099
    %vm1107 = vmor %vm1105, %vm1106
    %v1108 = vsel %vm1107, %v1099, %v1104
    %v1109 = vrsqrt.pop %v1039
    %v1110 = vmul.f32 %v1109, %v1039
    %v1111 = vmul.f32 %v1110, %v1109
    %v1112 = vmul.f32 0.5, %v1111
    %v1113 = vsub.f32 1.5, %v1112
    %v1114 = vmul.f32 %v1109, %v1113
    %vm1115 = vweird.f32 %v1039
    %vm1116 = vweird.f32 %v1109
    %vm1117 = vmor %vm1115, %vm1116
    %v1118 = vsel %vm1117, %v1109, %v1114
    %v1119 = vrsqrt.pop %v1040
    %v1120 = vmul.f32 %v1119, %v1040
    %v1121 = vmul.f32 %v1120, %v1119
    %v1122 = vmul.f32 0.5, %v1121
    %v1123 = vsub.f32 1.5, %v1122
    %v1124 = vmul.f32 %v1119, %v1123
    %vm1125 = vweird.f32 %v1040
    %vm1126 = vweird.f32 %v1119
    %vm1127 = vmor %vm1125, %vm1126
    %v1128 = vsel %vm1127, %v1119, %v1124
    %v1129 = vrsqrt.pop %v1041
    %v1130 = vmul.f32 %v1129, %v1041
    %v1131 = vmul.f32 %v1130, %v1129
    %v1132 = vmul.f32 0.5, %v1131
    %v1133 = vsub.f32 1.5, %v1132
    %v1134 = vmul.f32 %v1129, %v1133
    %vm1135 = vweird.f32 %v1041
    %vm1136 = vweird.f32 %v1129
    %vm1137 = vmor %vm1135, %vm1136
    %v1138 = vsel %vm1137, %v1129, %v1134
    %v1139 = vrsqrt.pop %v1042
    %v1140 = vmul.f32 %v1139, %v1042
    %v1141 = vmul.f32 %v1140, %v1139
    %v1142 = vmul.f32 0.5, %v1141
    %v1143 = vsub.f32 1.5, %v1142
    %v1144 = vmul.f32 %v1139, %v1143
    %vm1145 = vweird.f32 %v1042
    %vm1146 = vweird.f32 %v1139
    %vm1147 = vmor %vm1145, %vm1146
    %v1148 = vsel %vm1147, %v1139, %v1144
    %v1149 = vrsqrt.pop %v1043
    %v1150 = vmul.f32 %v1149, %v1043
    %v1151 = vmul.f32 %v1150, %v1149
    %v1152 = vmul.f32 0.5, %v1151
    %v1153 = vsub.f32 1.5, %v1152
    %v1154 = vmul.f32 %v1149, %v1153
    %vm1155 = vweird.f32 %v1043
    %vm1156 = vweird.f32 %v1149
    %vm1157 = vmor %vm1155, %vm1156
    %v1158 = vsel %vm1157, %v1149, %v1154
    %v1159 = vrsqrt.pop %v1044
    %v1160 = vmul.f32 %v1159, %v1044
    %v1161 = vmul.f32 %v1160, %v1159
    %v1162 = vmul.f32 0.5, %v1161
    %v1163 = vsub.f32 1.5, %v1162
    %v1164 = vmul.f32 %v1159, %v1163
    %vm1165 = vweird.f32 %v1044
    %vm1166 = vweird.f32 %v1159
    %vm1167 = vmor %vm1165, %vm1166
    %v1168 = vsel %vm1167, %v1159, %v1164
    %v1169 = vrsqrt.pop %v1045
    %v1170 = vmul.f32 %v1169, %v1045
    %v1171 = vmul.f32 %v1170, %v1169
    %v1172 = vmul.f32 0.5, %v1171
    %v1173 = vsub.f32 1.5, %v1172
    %v1174 = vmul.f32 %v1169, %v1173
    %vm1175 = vweird.f32 %v1045
    %vm1176 = vweird.f32 %v1169
    %vm1177 = vmor %vm1175, %vm1176
    %v1178 = vsel %vm1177, %v1169, %v1174
    %v1179 = vrsqrt.pop %v1046
    %v1180 = vmul.f32 %v1179, %v1046
    %v1181 = vmul.f32 %v1180, %v1179
    %v1182 = vmul.f32 0.5, %v1181
    %v1183 = vsub.f32 1.5, %v1182
    %v1184 = vmul.f32 %v1179, %v1183
    %vm1185 = vweird.f32 %v1046
    %vm1186 = vweird.f32 %v1179
    %vm1187 = vmor %vm1185, %vm1186
    %v1188 = vsel %vm1187, %v1179, %v1184
    %v1189 = vrsqrt.pop %v1047
    %v1190 = vmul.f32 %v1189, %v1047
    %v1191 = vmul.f32 %v1190, %v1189
    %v1192 = vmul.f32 0.5, %v1191
    %v1193 = vsub.f32 1.5, %v1192
    %v1194 = vmul.f32 %v1189, %v1193
    %vm1195 = vweird.f32 %v1047
    %vm1196 = vweird.f32 %v1189
    %vm1197 = vmor %vm1195, %vm1196
    %v1198 = vsel %vm1197, %v1189, %v1194
    %v1199 = vrsqrt.pop %v1048
    %v1200 = vmul.f32 %v1199, %v1048
    %v1201 = vmul.f32 %v1200, %v1199
    %v1202 = vmul.f32 0.5, %v1201
    %v1203 = vsub.f32 1.5, %v1202
    %v1204 = vmul.f32 %v1199, %v1203
    %vm1205 = vweird.f32 %v1048
    %vm1206 = vweird.f32 %v1199
    %vm1207 = vmor %vm1205, %vm1206
    %v1208 = vsel %vm1207, %v1199, %v1204
    %v1209 = vmul.f32 %v953, %v1058
    %v1210 = vmul.f32 %v954, %v1068
    %v1211 = vmul.f32 %v955, %v1078
    %v1212 = vmul.f32 %v956, %v1088
    %v1213 = vmul.f32 %v957, %v1098
    %v1214 = vmul.f32 %v958, %v1108
    %v1215 = vmul.f32 %v959, %v1118
    %v1216 = vmul.f32 %v960, %v1128
    %v1217 = vmul.f32 %v961, %v1138
    %v1218 = vmul.f32 %v962, %v1148
    %v1219 = vmul.f32 %v963, %v1158
    %v1220 = vmul.f32 %v964, %v1168
    %v1221 = vmul.f32 %v965, %v1178
    %v1222 = vmul.f32 %v966, %v1188
    %v1223 = vmul.f32 %v967, %v1198
    %v1224 = vmul.f32 %v968, %v1208
    %v1225 = vld [vmem:[%s3] sm:$0x1]
    %v1227 = vperm.slane %v1225, 0
    %v1229 = vmul.f32 %v1209, %v1227
    %v1230 = vmul.f32 %v1210, %v1227
    %v1231 = vmul.f32 %v1211, %v1227
    %v1232 = vmul.f32 %v1212, %v1227
    %v1233 = vmul.f32 %v1213, %v1227
    %v1234 = vmul.f32 %v1214, %v1227
    %v1235 = vmul.f32 %v1215, %v1227
    %v1236 = vmul.f32 %v1216, %v1227
    %v1237 = vmul.f32 %v1217, %v1227
    %v1238 = vmul.f32 %v1218, %v1227
    %v1239 = vmul.f32 %v1219, %v1227
    %v1240 = vmul.f32 %v1220, %v1227
    %v1241 = vmul.f32 %v1221, %v1227
    %v1242 = vmul.f32 %v1222, %v1227
    %v1243 = vmul.f32 %v1223, %v1227
    %v1244 = vmul.f32 %v1224, %v1227
    %v1245 = vld [vmem:[%s4] sm:$0x1]
    %v1247 = vperm.slane %v1245, 0
    %v1249 = vadd.f32 %v1229, %v1247
    %v1250 = vadd.f32 %v1230, %v1247
    %v1251 = vadd.f32 %v1231, %v1247
    %v1252 = vadd.f32 %v1232, %v1247
    %v1253 = vadd.f32 %v1233, %v1247
    %v1254 = vadd.f32 %v1234, %v1247
    %v1255 = vadd.f32 %v1235, %v1247
    %v1256 = vadd.f32 %v1236, %v1247
    %v1257 = vadd.f32 %v1237, %v1247
    %v1258 = vadd.f32 %v1238, %v1247
    %v1259 = vadd.f32 %v1239, %v1247
    %v1260 = vadd.f32 %v1240, %v1247
    %v1261 = vadd.f32 %v1241, %v1247
    %v1262 = vadd.f32 %v1242, %v1247
    %v1263 = vadd.f32 %v1243, %v1247
    %v1264 = vadd.f32 %v1244, %v1247
    %v1265 = vpack.c.bf16 %v1249, %v1249
    %v1266 = vpack.c.bf16 %v1250, %v1250
    %v1267 = vpack.c.bf16 %v1251, %v1251
    %v1268 = vpack.c.bf16 %v1252, %v1252
    %v1269 = vpack.c.bf16 %v1253, %v1253
    %v1270 = vpack.c.bf16 %v1254, %v1254
    %v1271 = vpack.c.bf16 %v1255, %v1255
    %v1272 = vpack.c.bf16 %v1256, %v1256
    %v1273 = vpack.c.bf16 %v1257, %v1257
    %v1274 = vpack.c.bf16 %v1258, %v1258
    %v1275 = vpack.c.bf16 %v1259, %v1259
    %v1276 = vpack.c.bf16 %v1260, %v1260
    %v1277 = vpack.c.bf16 %v1261, %v1261
    %v1278 = vpack.c.bf16 %v1262, %v1262
    %v1279 = vpack.c.bf16 %v1263, %v1263
    %v1280 = vpack.c.bf16 %v1264, %v1264
    %1281 = vst [vmem:[#allocation7] sm:$0xf] %v1265
    %1282 = vst [vmem:[#allocation7 + $0x4] sm:$0xf] %v1266
    %1283 = vst [vmem:[#allocation7 + $0x8] sm:$0xf] %v1267
    %1284 = vst [vmem:[#allocation7 + $0xc] sm:$0xf] %v1268
    %1285 = vst [vmem:[#allocation7 + $0x10] sm:$0xf] %v1269
    %1286 = vst [vmem:[#allocation7 + $0x14] sm:$0xf] %v1270
    %1287 = vst [vmem:[#allocation7 + $0x18] sm:$0xf] %v1271
    %1288 = vst [vmem:[#allocation7 + $0x1c] sm:$0xf] %v1272
    %1289 = vst [vmem:[#allocation7 + $0x20] sm:$0xf] %v1273
    %1290 = vst [vmem:[#allocation7 + $0x24] sm:$0xf] %v1274
    %1291 = vst [vmem:[#allocation7 + $0x28] sm:$0xf] %v1275
    %1292 = vst [vmem:[#allocation7 + $0x2c] sm:$0xf] %v1276
    %1293 = vst [vmem:[#allocation7 + $0x30] sm:$0xf] %v1277
    %1294 = vst [vmem:[#allocation7 + $0x34] sm:$0xf] %v1278
    %1295 = vst [vmem:[#allocation7 + $0x38] sm:$0xf] %v1279
    %1296 = vst [vmem:[#allocation7 + $0x3c] sm:$0xf] %v1280
    // Predicated region
    $region30: #{tpu_custom_call.1} parent=1 // pred_check
      _
    $region31: #{tpu_custom_call.1} parent=1 // pred_check_branch
      %1298 = sbr.rel (0) target = $region33
    $region32: #{tpu_custom_call.1} parent=1 // pred_region
      %1300 = vsyncadd [#allocation4], 0
      %s1301 = sshll.u32 [#allocation7], 4
      %s1302 = int_to_ptr.vmem [resolvable:$true] %s1301
      %s1303 = sshll.u32 %s5, 4
      %s1304 = int_to_ptr.hbm [resolvable:$true] %s1303
      %1309 = dma.vmem_to_hbm [thread:$0]  %s1302, 1024, %s1304, [#allocation4], 64, 64, 4
    $region33: #{tpu_custom_call.1} parent=1 // pred_fallthru
      _
    // Predicated region
    $region34: #{tpu_custom_call.1} parent=1 // pred_check
      _
    $region35: #{tpu_custom_call.1} parent=1 // pred_check_branch
      %1311 = sbr.rel (0) target = $region37
    $region36: #{tpu_custom_call.1} parent=1 // pred_region
      %1313 = dma.done [#allocation4], 1024
    $region37: #{tpu_custom_call.1} parent=1 // pred_fallthru
      _
    %1314 = vsyncpa [#allocation3], 1
    %1315 = vsyncpa [#allocation6], 1
    %1316 = vsyncpa [#allocation4], 1

</llo_original>
